<compile_context>
chip_gen: v7x
topology: tpu7x:2x2x1
jax: 0.10.0
libtpu: 0.0.40
codegen_flags: <defaults>
</compile_context>

<pallas_src>
import math

import jax
import jax.numpy as jnp
from jax.experimental import pallas as pl
from jax.experimental.pallas import tpu as pltpu


def _round_up(x, m):
    return ((x + m - 1) // m) * m


def _round_down(x, m):
    return (x // m) * m


def ensemble_matmul_kernel(x_ref, w_ref, o_ref):
    """One grid step = one (batch tile, K tile).

    x_ref: VMEM [tb, tk]  bf16 input K-slice for this batch tile
    w_ref: VMEM [Cp, tk]  bf16 combined (ew-folded) weights, lane-dense over D
    o_ref: VMEM [tb, Cp]  f32 resident accumulator (revisited across k)
    """
    k = pl.program_id(1)

    @pl.when(k == 0)
    def _():
        o_ref[...] = jnp.zeros_like(o_ref)

    # [tb, tk] . [Cp, tk], contracting over the K slice -> [tb, Cp], f32 MXU acc.
    # (Same [N,K]-contracted dot_general orientation as the previous kernel,
    #  which lowered and ran cleanly; keeps the HBM weight stream byte-minimal.)
    o_ref[...] += jax.lax.dot_general(
        x_ref[...], w_ref[...],
        dimension_numbers=(((1,), (1,)), ((), ())),
        preferred_element_type=jnp.float32,
    )


def ensemble_inference(x, weights, biases, ensemble_weights):
    """x: [B, C_in, H, W]; weights: [M, D, num_classes]; biases: [M, num_classes];
    ensemble_weights: [M]. Returns [B, num_classes] float32 logits."""
    B = x.shape[0]
    D = int(math.prod(x.shape[1:]))
    M, Dw, C = weights.shape
    assert Dw == D and biases.shape == (M, C) and ensemble_weights.shape == (M,)

    ew = ensemble_weights.astype(jnp.float32)

    # One-time algebraic collapse (exact for linear members):
    #   sum_m ew[m] * (x @ W_m + b_m) = x @ W_comb + b_eff
    w_comb = jnp.einsum("m,mdc->cd", ew, weights.astype(jnp.float32))  # [C, D]
    b_eff = ew @ biases.astype(jnp.float32)                            # [C]

    # Sublane-pad the class dim (bf16 packs 16 rows per vreg); keep D minor.
    Cp = _round_up(C, 16)
    w_comb = jnp.pad(w_comb, ((0, Cp - C), (0, 0)))

    # Batch tiling: "parallel" grid axis (shards across v7x's 2 TensorCores
    # when B is large; a single tile at demo scale).
    tb = min(512, _round_up(B, 8))
    B_pad = _round_up(B, tb)
    n_b = B_pad // tb

    # K-tile sized from VMEM capacity at trace time.
    try:
        vmem_cap = int(pltpu.get_tpu_info().vmem_capacity_bytes)
    except Exception:  # pragma: no cover - conservative fallback (v7x per-TC)
        vmem_cap = 64 * 1024 * 1024
    budget = vmem_cap // 2  # headroom for compiler scratch / pipeline state
    # Double-buffered bf16 x + W streams (2 bufs * 2 bytes) + resident f32 out.
    tk_cap = (budget - tb * Cp * 4) // (4 * (tb + Cp))
    tk = max(128, min(_round_down(tk_cap, 128), _round_up(D, 128)))
    D_pad = _round_up(D, tk)  # zero-pad D instead of a full-D fallback block
    n_k = D_pad // tk

    working_set = 4 * (tb + Cp) * tk + tb * Cp * 4
    vmem_limit = int(min(vmem_cap - (4 << 20),
                         max(32 << 20, working_set + (16 << 20))))

    # bf16 streaming operands, zero-padded (exact: padded rows/cols contribute 0).
    x_flat = x.reshape(B, D).astype(jnp.bfloat16)
    x_flat = jnp.pad(x_flat, ((0, B_pad - B), (0, D_pad - D)))
    w_pad = jnp.pad(w_comb, ((0, 0), (0, D_pad - D))).astype(jnp.bfloat16)

    grid_spec = pltpu.PrefetchScalarGridSpec(
        num_scalar_prefetch=0,
        grid=(n_b, n_k),
        in_specs=[
            pl.BlockSpec((tb, tk), lambda b, k: (b, k)),   # x K-slice, this batch tile
            pl.BlockSpec((Cp, tk), lambda b, k: (0, k)),   # combined-weight K-slice
        ],
        out_specs=pl.BlockSpec((tb, Cp), lambda b, k: (b, 0)),  # resident accumulator
    )

    out_pad = pl.pallas_call(
        ensemble_matmul_kernel,
        out_shape=jax.ShapeDtypeStruct((B_pad, Cp), jnp.float32),
        grid_spec=grid_spec,
        compiler_params=pltpu.CompilerParams(
            dimension_semantics=("parallel", "arbitrary"),
            vmem_limit_bytes=vmem_limit,
        ),
    )(x_flat, w_pad)

    # Hoisted bias added once here (XLA fuses the tiny [B, C] add).
    return out_pad[:B, :C] + b_eff[None, :]


if __name__ == "__main__":
    # Small deterministic setup consistent with the module:
    #   3 ensemble members, 10-class output, NCHW image input.
    key = jax.random.PRNGKey(0)
    B, C_in, H, W = 2, 4, 16, 16
    num_classes = 10
    num_models = 3
    D = C_in * H * W

    kx, kw, kb = jax.random.split(key, 3)
    x = jax.random.normal(kx, (B, C_in, H, W), dtype=jnp.float32)
    # Synthetic "models": one linear classifier per ensemble member.
    weights = 0.05 * jax.random.normal(kw, (num_models, D, num_classes), jnp.float32)
    biases = 0.1 * jax.random.normal(kb, (num_models, num_classes), jnp.float32)

    # Genetic-algorithm weights from the module, normalized to sum to 1.
    ga_weights = jnp.array([0.1646, 0.1443, 0.8192], dtype=jnp.float32)
    ensemble_weights = ga_weights / jnp.sum(ga_weights)

    out = ensemble_inference(x, weights, biases, ensemble_weights)
    out = jax.block_until_ready(out)

    # Pure-JAX f32 reference of the PyTorch forward: sum_m ew[m]*(x @ W_m + b_m),
    # with the input rounded to bf16 to match the kernel's streaming precision.
    x_r = x.reshape(B, D).astype(jnp.bfloat16).astype(jnp.float32)
    preds = jnp.einsum("bd,mdc->mbc", x_r, weights) + biases[:, None, :]
    ref = jnp.sum(preds * ensemble_weights[:, None, None], axis=0)

    assert out.shape == (B, num_classes)
    err = jnp.max(jnp.abs(out - ref))
    assert jnp.allclose(out, ref, atol=2e-2, rtol=2e-2), f"max abs err {err}"
    print("KERNEL_OK")
</pallas_src>

<mosaic_0001>
module attributes {stable_mosaic.version = 11 : i64} {
  func.func @ensemble_matmul_kernel(%arg0: i32, %arg1: i32, %arg2: memref<8x1024xbf16, #tpu.memory_space<vmem>>, %arg3: memref<16x1024xbf16, #tpu.memory_space<vmem>>, %arg4: memref<8x16xf32, #tpu.memory_space<vmem>>) attributes {dimension_semantics = [#tpu.dimension_semantics<parallel>, #tpu.dimension_semantics<arbitrary>], iteration_bounds = array<i64: 1, 1>, scalar_prefetch = 0 : i64, scratch_operands = 0 : i64, tpu.core_type = #tpu.core_type<tc>, window_params = [{transform_indices = @transform_0, window_bounds = array<i64: 8, 1024>}, {transform_indices = @transform_1, window_bounds = array<i64: 16, 1024>}, {transform_indices = @transform_2, window_bounds = array<i64: 8, 16>}]} {
    %c0_i32 = arith.constant 0 : i32
    %0 = arith.cmpi eq, %arg1, %c0_i32 : i32
    %1 = arith.extui %0 : i1 to i32
    %c0_i32_0 = arith.constant 0 : i32
    %2 = arith.cmpi ne, %1, %c0_i32_0 : i32
    scf.if %2 {
      %cst_8 = arith.constant 0.000000e+00 : f32
      %9 = vector.broadcast %cst_8 : f32 to vector<8x16xf32>
      %c0_9 = arith.constant 0 : index
      %c0_10 = arith.constant 0 : index
      %10 = vector.load %arg4[%c0_9, %c0_10] : memref<8x16xf32, #tpu.memory_space<vmem>>, vector<8x16xf32>
      tpu.vector_store %arg4[%c0_9, %c0_10], %9 {strides = array<i32>} : memref<8x16xf32, #tpu.memory_space<vmem>>, vector<8x16xf32>,
    } else {
    }
    %c0 = arith.constant 0 : index
    %c0_1 = arith.constant 0 : index
    %3 = vector.load %arg4[%c0, %c0_1] : memref<8x16xf32, #tpu.memory_space<vmem>>, vector<8x16xf32>
    %c0_2 = arith.constant 0 : index
    %c0_3 = arith.constant 0 : index
    %4 = vector.load %arg2[%c0_2, %c0_3] : memref<8x1024xbf16, #tpu.memory_space<vmem>>, vector<8x1024xbf16>
    %c0_4 = arith.constant 0 : index
    %c0_5 = arith.constant 0 : index
    %5 = vector.load %arg3[%c0_4, %c0_5] : memref<16x1024xbf16, #tpu.memory_space<vmem>>, vector<16x1024xbf16>
    %cst = arith.constant dense<0.000000e+00> : vector<8x16xf32>
    %6 = tpu.matmul %4, %5, %cst {dimension_numbers = #tpu.dot_dimension_numbers<[1], [1], [0], [0], [0, 0, 1, 0], [], []>} : vector<8x1024xbf16>, vector<16x1024xbf16>, vector<8x16xf32> -> vector<8x16xf32>
    %7 = arith.addf %3, %6 : vector<8x16xf32>
    %c0_6 = arith.constant 0 : index
    %c0_7 = arith.constant 0 : index
    %8 = vector.load %arg4[%c0_6, %c0_7] : memref<8x16xf32, #tpu.memory_space<vmem>>, vector<8x16xf32>
    tpu.vector_store %arg4[%c0_6, %c0_7], %7 {strides = array<i32>} : memref<8x16xf32, #tpu.memory_space<vmem>>, vector<8x16xf32>,
    return
  }
  func.func @transform_0(%arg0: i32, %arg1: i32) -> (i32, i32) {
    %c0_i32 = arith.constant 0 : i32
    return %arg0, %arg1 : i32, i32
  }
  func.func @transform_1(%arg0: i32, %arg1: i32) -> (i32, i32) {
    %c0_i32 = arith.constant 0 : i32
    %c0_i32_0 = arith.constant 0 : i32
    return %c0_i32, %arg1 : i32, i32
  }
  func.func @transform_2(%arg0: i32, %arg1: i32) -> (i32, i32) {
    %c0_i32 = arith.constant 0 : i32
    %c0_i32_0 = arith.constant 0 : i32
    return %arg0, %c0_i32 : i32, i32
  }
}

</mosaic_0001>

<llo_original>
// kernel: tpu_custom_call.1
$region0: #{tpu_custom_call.1}
  #allocation0 [shape = 'u32[]', space=smem, size = 0x4, offset = 0x4, fixed_abs, tag = 'smem constant byte address 0x4 - core index']
  #allocation1 [shape = 'u32[144,128]{1,0:T(1,128)}', space=vmem, size = 0x12000, scoped, tag = 'internal scratch']
  %s0 = inlined_call_operand.hbm [shape: bf16[8,1024], index: 0, kind: input, shape index: {}]
  %s1 = inlined_call_operand.hbm [shape: bf16[16,1024], index: 1, kind: input, shape index: {}]
  %s2 = inlined_call_operand.hbm [shape: f32[8,16], index: 2, kind: output, shape index: {}]
  %s3 = sld [smem:[#allocation0]]
  $region30: #{tpu_custom_call.1} parent=0
    _
  %s5 = ssub.s32 1, %s3
  %s6 = scalar_select 0, %s5, %s3
  $region1: #{tpu_custom_call.1} parent=0
    #allocation2 [shape = 'u8[16384]{0}', space=vmem, size = 0x4000, scoped, tag = 'input window, operand 0, single buffered']
    #allocation3 [shape = 's32[1]{0}', space=sflag, size = 0x4, scoped, tag = 'scoped memory for tpu_custom_call.1']
    #allocation4 [shape = 's32[1]{0}', space=sflag, size = 0x4, scoped, tag = 'scoped memory for tpu_custom_call.1']
    #allocation5 [shape = 'u8[32768]{0}', space=vmem, size = 0x8000, scoped, tag = 'input window, operand 1, single buffered']
    #allocation6 [shape = 's32[1]{0}', space=sflag, size = 0x4, scoped, tag = 'scoped memory for tpu_custom_call.1']
    #allocation7 [shape = 'u8[4096]{0}', space=vmem, size = 0x1000, scoped, tag = 'output window, operand 0, single buffered']
    %7 = vsyncpa [#allocation3], 0
    %8 = vsyncpa [#allocation6], 0
    %9 = vsyncpa [#allocation4], 0
    // Predicated region
    $region2: #{tpu_custom_call.1} parent=1 // pred_check
      _
    $region3: #{tpu_custom_call.1} parent=1 // pred_check_branch
      %11 = sbr.rel (0) target = $region5
    $region4: #{tpu_custom_call.1} parent=1 // pred_region
      %s13 = ssub.s32 512, 512
      %14 = vsyncadd [#allocation3], %s13
      %s16 = sshll.u32 [#allocation2], 4
      %s17 = int_to_ptr.vmem [resolvable:$true] %s16
      %19 = dma.hbm_to_vmem [thread:$0]  %s0, 512, %s17, [#allocation3]
    $region5: #{tpu_custom_call.1} parent=1 // pred_fallthru
      _
    // Predicated region
    $region6: #{tpu_custom_call.1} parent=1 // pred_check
      _
    $region7: #{tpu_custom_call.1} parent=1 // pred_check_branch
      %21 = sbr.rel (0) target = $region9
    $region8: #{tpu_custom_call.1} parent=1 // pred_region
      %s23 = ssub.s32 1024, 1024
      %24 = vsyncadd [#allocation6], %s23
      %s25 = sshll.u32 [#allocation5], 4
      %s26 = int_to_ptr.vmem [resolvable:$true] %s25
      %31 = dma.hbm_to_vmem [thread:$0]  %s1, 1024, %s26, [#allocation6], 512, 512, 32
    $region9: #{tpu_custom_call.1} parent=1 // pred_fallthru
      _
    // Predicated region
    $region10: #{tpu_custom_call.1} parent=1 // pred_check
      _
    $region11: #{tpu_custom_call.1} parent=1 // pred_check_branch
      %33 = sbr.rel (0) target = $region13
    $region12: #{tpu_custom_call.1} parent=1 // pred_region
      %34 = dma.done [#allocation3], 512
    $region13: #{tpu_custom_call.1} parent=1 // pred_fallthru
      _
    // Predicated region
    $region14: #{tpu_custom_call.1} parent=1 // pred_check
      _
    $region15: #{tpu_custom_call.1} parent=1 // pred_check_branch
      %36 = sbr.rel (0) target = $region17
    $region16: #{tpu_custom_call.1} parent=1 // pred_region
      %37 = dma.done [#allocation6], 1024
    $region17: #{tpu_custom_call.1} parent=1 // pred_fallthru
      _
    %p39 = scmp.eq.s32.totalorder 0, 0
    // Predicated region
    $region18: #{tpu_custom_call.1} parent=1 // pred_check
      %p40 = pneg %p39
    $region19: #{tpu_custom_call.1} parent=1 // pred_check_branch
      %42 = sbr.rel (%p40) target = $region21
    $region20: #{tpu_custom_call.1} parent=1 // pred_region
      %vm43 = vcmask 130048
      %44 = vst.msk [vmem:[#allocation7] sm:$0xff] %vm43, 0.0
    $region21: #{tpu_custom_call.1} parent=1 // pred_fallthru
      _
    %v45 = vld [vmem:[#allocation7] sm:$0xff]
    %v46 = vld [vmem:[#allocation2] sm:$0xff]
    %v47 = vld [vmem:[#allocation2 + $0x8] sm:$0xff]
    %v48 = vld [vmem:[#allocation2 + $0x10] sm:$0xff]
    %v49 = vld [vmem:[#allocation2 + $0x18] sm:$0xff]
    %v50 = vld [vmem:[#allocation5] sm:$0xff]
    %v51 = vld [vmem:[#allocation5 + $0x8] sm:$0xff]
    %v52 = vld [vmem:[#allocation5 + $0x10] sm:$0xff]
    %v53 = vld [vmem:[#allocation5 + $0x18] sm:$0xff]
    %v54 = vld [vmem:[#allocation5 + $0x20] sm:$0xff]
    %v55 = vld [vmem:[#allocation5 + $0x28] sm:$0xff]
    %v56 = vld [vmem:[#allocation5 + $0x30] sm:$0xff]
    %v57 = vld [vmem:[#allocation5 + $0x38] sm:$0xff]
    %v62 = vunpack.c.l.b16 %v46
    %v63 = vunpack.c.h.b16 %v46
    %v64 = vunpack.c.l.b16 %v47
    %v65 = vunpack.c.h.b16 %v47
    %v66 = vunpack.c.l.b16 %v48
    %v67 = vunpack.c.h.b16 %v48
    %v68 = vunpack.c.l.b16 %v49
    %v69 = vunpack.c.h.b16 %v49
    %v70 = vpack.c.b16 %v62, %v62
    %v71 = vpack.c.b16 %v63, %v63
    %v72 = vpack.c.b16 %v64, %v64
    %v73 = vpack.c.b16 %v65, %v65
    %v74 = vpack.c.b16 %v66, %v66
    %v75 = vpack.c.b16 %v67, %v67
    %v76 = vpack.c.b16 %v68, %v68
    %v77 = vpack.c.b16 %v69, %v69
    %v94 = vunpack.c.l.b16 %v50
    %v95 = vunpack.c.h.b16 %v50
    %v96 = vunpack.c.l.b16 %v51
    %v97 = vunpack.c.h.b16 %v51
    %v98 = vunpack.c.l.b16 %v52
    %v99 = vunpack.c.h.b16 %v52
    %v100 = vunpack.c.l.b16 %v53
    %v101 = vunpack.c.h.b16 %v53
    %v102 = vunpack.c.l.b16 %v54
    %v103 = vunpack.c.h.b16 %v54
    %v104 = vunpack.c.l.b16 %v55
    %v105 = vunpack.c.h.b16 %v55
    %v106 = vunpack.c.l.b16 %v56
    %v107 = vunpack.c.h.b16 %v56
    %v108 = vunpack.c.l.b16 %v57
    %v109 = vunpack.c.h.b16 %v57
    %v110 = vpack.c.b16 %v102, %v94
    %v111 = vpack.c.b16 %v103, %v95
    %v112 = vpack.c.b16 %v104, %v96
    %v113 = vpack.c.b16 %v105, %v97
    %v114 = vpack.c.b16 %v106, %v98
    %v115 = vpack.c.b16 %v107, %v99
    %v116 = vpack.c.b16 %v108, %v100
    %v117 = vpack.c.b16 %v109, %v101
    %126 = vmatprep.subr.bf16.mxu0 %v111
    %127 = vmatpush1.bf16.xpose.msra.mxu0 %v110
    %128 = vmatprep.subr.bf16.mxu0 0
    %129 = vmatpush1.bf16.xpose.msra.mxu0 0
    %130 = vmatprep.subr.bf16.mxu0 0
    %131 = vmatpush1.bf16.xpose.msra.mxu0 0
    %132 = vmatprep.subr.bf16.mxu0 0
    %133 = vmatpush1.bf16.xpose.msra.mxu0 0
    %134 = vmatprep.subr.bf16.mxu0 0
    %135 = vmatpush1.bf16.xpose.msra.mxu0 0
    %136 = vmatprep.subr.bf16.mxu0 0
    %137 = vmatpush1.bf16.xpose.msra.mxu0 0
    %138 = vmatprep.subr.bf16.mxu0 0
    %139 = vmatpush1.bf16.xpose.msra.mxu0 0
    %140 = vmatprep.subr.bf16.mxu0 0
    %141 = vmatpush1.bf16.xpose.msra.mxu0 0
    %142 = vmatprep.subr.bf16.mxu0 0
    %143 = vmatpush1.bf16.xpose.msra.mxu0 0
    %144 = vmatprep.subr.bf16.mxu0 0
    %145 = vmatpush1.bf16.xpose.msra.mxu0 0
    %146 = vmatprep.subr.bf16.mxu0 0
    %147 = vmatpush1.bf16.xpose.msra.mxu0 0
    %148 = vmatprep.subr.bf16.mxu0 0
    %149 = vmatpush1.bf16.xpose.msra.mxu0 0
    %150 = vmatprep.subr.bf16.mxu0 0
    %151 = vmatpush1.bf16.xpose.msra.mxu0 0
    %152 = vmatprep.subr.bf16.mxu0 0
    %153 = vmatpush1.bf16.xpose.msra.mxu0 0
    %154 = vmatprep.subr.bf16.mxu0 0
    %155 = vmatpush1.bf16.xpose.msra.mxu0 0
    %156 = vmatprep.subr.bf16.mxu0 0
    %157 = vmatpush1.bf16.xpose.msra.mxu0 0
    %158 = vmatprep.mubr.bf16.mxu0 %v71
    %159 = vmatmul.mubr.bf16.gmra.mrb[0].mxu0 %v70
    %v160 = vpop.f32.mrb[0].mxu0
    %v161 = vadd.f32 0.0, %v160
    %v162 = vpop.f32.mrb[0].mxu0
    %v163 = vpop.f32.mrb[0].mxu0
    %v164 = vpop.f32.mrb[0].mxu0
    %165 = vdwg.mxu0
    %166 = vmatprep.subr.bf16.mxu0 %v113
    %167 = vmatpush1.bf16.xpose.msra.mxu0 %v112
    %168 = vmatprep.subr.bf16.mxu0 0
    %169 = vmatpush1.bf16.xpose.msra.mxu0 0
    %170 = vmatprep.subr.bf16.mxu0 0
    %171 = vmatpush1.bf16.xpose.msra.mxu0 0
    %172 = vmatprep.subr.bf16.mxu0 0
    %173 = vmatpush1.bf16.xpose.msra.mxu0 0
    %174 = vmatprep.subr.bf16.mxu0 0
    %175 = vmatpush1.bf16.xpose.msra.mxu0 0
    %176 = vmatprep.subr.bf16.mxu0 0
    %177 = vmatpush1.bf16.xpose.msra.mxu0 0
    %178 = vmatprep.subr.bf16.mxu0 0
    %179 = vmatpush1.bf16.xpose.msra.mxu0 0
    %180 = vmatprep.subr.bf16.mxu0 0
    %181 = vmatpush1.bf16.xpose.msra.mxu0 0
    %182 = vmatprep.subr.bf16.mxu0 0
    %183 = vmatpush1.bf16.xpose.msra.mxu0 0
    %184 = vmatprep.subr.bf16.mxu0 0
    %185 = vmatpush1.bf16.xpose.msra.mxu0 0
    %186 = vmatprep.subr.bf16.mxu0 0
    %187 = vmatpush1.bf16.xpose.msra.mxu0 0
    %188 = vmatprep.subr.bf16.mxu0 0
    %189 = vmatpush1.bf16.xpose.msra.mxu0 0
    %190 = vmatprep.subr.bf16.mxu0 0
    %191 = vmatpush1.bf16.xpose.msra.mxu0 0
    %192 = vmatprep.subr.bf16.mxu0 0
    %193 = vmatpush1.bf16.xpose.msra.mxu0 0
    %194 = vmatprep.subr.bf16.mxu0 0
    %195 = vmatpush1.bf16.xpose.msra.mxu0 0
    %196 = vmatprep.subr.bf16.mxu0 0
    %197 = vmatpush1.bf16.xpose.msra.mxu0 0
    %198 = vmatprep.mubr.bf16.mxu0 %v73
    %199 = vmatmul.mubr.bf16.gmra.mrb[0].mxu0 %v72
    %v200 = vpop.f32.mrb[0].mxu0
    %v201 = vadd.f32 %v161, %v200
    %v202 = vpop.f32.mrb[0].mxu0
    %v203 = vpop.f32.mrb[0].mxu0
    %v204 = vpop.f32.mrb[0].mxu0
    %205 = vdwg.mxu0
    %206 = vmatprep.subr.bf16.mxu0 %v115
    %207 = vmatpush1.bf16.xpose.msra.mxu0 %v114
    %208 = vmatprep.subr.bf16.mxu0 0
    %209 = vmatpush1.bf16.xpose.msra.mxu0 0
    %210 = vmatprep.subr.bf16.mxu0 0
    %211 = vmatpush1.bf16.xpose.msra.mxu0 0
    %212 = vmatprep.subr.bf16.mxu0 0
    %213 = vmatpush1.bf16.xpose.msra.mxu0 0
    %214 = vmatprep.subr.bf16.mxu0 0
    %215 = vmatpush1.bf16.xpose.msra.mxu0 0
    %216 = vmatprep.subr.bf16.mxu0 0
    %217 = vmatpush1.bf16.xpose.msra.mxu0 0
    %218 = vmatprep.subr.bf16.mxu0 0
    %219 = vmatpush1.bf16.xpose.msra.mxu0 0
    %220 = vmatprep.subr.bf16.mxu0 0
    %221 = vmatpush1.bf16.xpose.msra.mxu0 0
    %222 = vmatprep.subr.bf16.mxu0 0
    %223 = vmatpush1.bf16.xpose.msra.mxu0 0
    %224 = vmatprep.subr.bf16.mxu0 0
    %225 = vmatpush1.bf16.xpose.msra.mxu0 0
    %226 = vmatprep.subr.bf16.mxu0 0
    %227 = vmatpush1.bf16.xpose.msra.mxu0 0
    %228 = vmatprep.subr.bf16.mxu0 0
    %229 = vmatpush1.bf16.xpose.msra.mxu0 0
    %230 = vmatprep.subr.bf16.mxu0 0
    %231 = vmatpush1.bf16.xpose.msra.mxu0 0
    %232 = vmatprep.subr.bf16.mxu0 0
    %233 = vmatpush1.bf16.xpose.msra.mxu0 0
    %234 = vmatprep.subr.bf16.mxu0 0
    %235 = vmatpush1.bf16.xpose.msra.mxu0 0
    %236 = vmatprep.subr.bf16.mxu0 0
    %237 = vmatpush1.bf16.xpose.msra.mxu0 0
    %238 = vmatprep.mubr.bf16.mxu0 %v75
    %239 = vmatmul.mubr.bf16.gmra.mrb[0].mxu0 %v74
    %v240 = vpop.f32.mrb[0].mxu0
    %v241 = vadd.f32 %v201, %v240
    %v242 = vpop.f32.mrb[0].mxu0
    %v243 = vpop.f32.mrb[0].mxu0
    %v244 = vpop.f32.mrb[0].mxu0
    %245 = vdwg.mxu0
    %246 = vmatprep.subr.bf16.mxu0 %v117
    %247 = vmatpush1.bf16.xpose.msra.mxu0 %v116
    %248 = vmatprep.subr.bf16.mxu0 0
    %249 = vmatpush1.bf16.xpose.msra.mxu0 0
    %250 = vmatprep.subr.bf16.mxu0 0
    %251 = vmatpush1.bf16.xpose.msra.mxu0 0
    %252 = vmatprep.subr.bf16.mxu0 0
    %253 = vmatpush1.bf16.xpose.msra.mxu0 0
    %254 = vmatprep.subr.bf16.mxu0 0
    %255 = vmatpush1.bf16.xpose.msra.mxu0 0
    %256 = vmatprep.subr.bf16.mxu0 0
    %257 = vmatpush1.bf16.xpose.msra.mxu0 0
    %258 = vmatprep.subr.bf16.mxu0 0
    %259 = vmatpush1.bf16.xpose.msra.mxu0 0
    %260 = vmatprep.subr.bf16.mxu0 0
    %261 = vmatpush1.bf16.xpose.msra.mxu0 0
    %262 = vmatprep.subr.bf16.mxu0 0
    %263 = vmatpush1.bf16.xpose.msra.mxu0 0
    %264 = vmatprep.subr.bf16.mxu0 0
    %265 = vmatpush1.bf16.xpose.msra.mxu0 0
    %266 = vmatprep.subr.bf16.mxu0 0
    %267 = vmatpush1.bf16.xpose.msra.mxu0 0
    %268 = vmatprep.subr.bf16.mxu0 0
    %269 = vmatpush1.bf16.xpose.msra.mxu0 0
    %270 = vmatprep.subr.bf16.mxu0 0
    %271 = vmatpush1.bf16.xpose.msra.mxu0 0
    %272 = vmatprep.subr.bf16.mxu0 0
    %273 = vmatpush1.bf16.xpose.msra.mxu0 0
    %274 = vmatprep.subr.bf16.mxu0 0
    %275 = vmatpush1.bf16.xpose.msra.mxu0 0
    %276 = vmatprep.subr.bf16.mxu0 0
    %277 = vmatpush1.bf16.xpose.msra.mxu0 0
    %278 = vmatprep.mubr.bf16.mxu0 %v77
    %279 = vmatmul.mubr.bf16.gmra.mrb[0].mxu0 %v76
    %v280 = vpop.f32.mrb[0].mxu0
    %v281 = vadd.f32 %v241, %v280
    %v282 = vpop.f32.mrb[0].mxu0
    %v283 = vpop.f32.mrb[0].mxu0
    %v284 = vpop.f32.mrb[0].mxu0
    %285 = vdwg.mxu0
    %v286 = vadd.f32 %v45, %v281
    %vm287 = vcmask 130048
    %288 = vst.msk [vmem:[#allocation7] sm:$0xff] %vm287, %v286
    // Predicated region
    $region22: #{tpu_custom_call.1} parent=1 // pred_check
      _
    $region23: #{tpu_custom_call.1} parent=1 // pred_check_branch
      %290 = sbr.rel (0) target = $region25
    $region24: #{tpu_custom_call.1} parent=1 // pred_region
      %s292 = ssub.s32 128, 128
      %293 = vsyncadd [#allocation4], %s292
      %s295 = sshll.u32 [#allocation7], 4
      %s296 = int_to_ptr.vmem [resolvable:$true] %s295
      %298 = dma.vmem_to_hbm [thread:$0]  %s296, 128, %s2, [#allocation4]
    $region25: #{tpu_custom_call.1} parent=1 // pred_fallthru
      _
    // Predicated region
    $region26: #{tpu_custom_call.1} parent=1 // pred_check
      _
    $region27: #{tpu_custom_call.1} parent=1 // pred_check_branch
      %300 = sbr.rel (0) target = $region29
    $region28: #{tpu_custom_call.1} parent=1 // pred_region
      %301 = dma.done [#allocation4], 128
    $region29: #{tpu_custom_call.1} parent=1 // pred_fallthru
      _
    %302 = vsyncpa [#allocation3], 1
    %303 = vsyncpa [#allocation6], 1
    %304 = vsyncpa [#allocation4], 1

</llo_original>
